<compile_context>
chip_gen: v6e
topology: v6e:2x2x1
jax: 0.10.0
libtpu: 0.0.40
codegen_flags: <defaults>
</compile_context>

<pallas_src>
import functools
import math

import jax
import jax.numpy as jnp
from jax import lax
from jax.experimental import pallas as pl
from jax.experimental.pallas import tpu as pltpu


def _round_up(x, m):
    return (x + m - 1) // m * m


def _gemm_bias_kernel(p_ref, w_ref, b_ref, o_ref, acc_ref):
    """Tiled  out = patches @ weight2d + bias  with f32 MXU accumulation.

    Grid = (M tiles ["parallel"], K tiles ["arbitrary"]).  The f32 accumulator
    lives in VMEM scratch; init / finalize are gated with pl.when so the kernel
    is correct for any number of K tiles (including 1).
    """
    k = pl.program_id(1)

    @pl.when(k == 0)
    def _():
        acc_ref[...] = jnp.zeros_like(acc_ref)

    acc_ref[...] += jnp.dot(p_ref[...], w_ref[...],
                            preferred_element_type=jnp.float32)

    @pl.when(k == pl.num_programs(1) - 1)
    def _():
        o_ref[...] = (acc_ref[...] + b_ref[...]).astype(o_ref.dtype)


def _phm_weight(A, Fp):
    """weight = sum_i kron(A[i], F[i])  ->  (C_out, C_in, KD, KH, KW).

    Matches torch `kronecker_product1(A, F).sum(dim=0)` of the reference module.
    """
    n = A.shape[0]
    O, I = Fp.shape[1], Fp.shape[2]
    KD, KH, KW = Fp.shape[3], Fp.shape[4], Fp.shape[5]
    res = A[:, :, None, :, None, None, None, None] * Fp[:, None, :, None, :, :, :, :]
    return res.reshape(n, n * O, n * I, KD, KH, KW).sum(axis=0)


def _im2col_ndhwc(x, KD, KH, KW, stride, dilation, OD, OH, OW):
    """x: (N, D_pad, H_pad, W_pad, C_in) -> (N, OD, OH, OW, KD*KH*KW*C_in).

    Last-dim ordering is (kd, kh, kw, c_in), matching the flattened weight.
    Pure layout plumbing (slices/concat) done in the input dtype (bf16), left to XLA.
    """
    N = x.shape[0]
    C_in = x.shape[-1]
    cols = []
    for kd in range(KD):
        d0 = kd * dilation
        for kh in range(KH):
            h0 = kh * dilation
            for kw in range(KW):
                w0 = kw * dilation
                sl = lax.slice(
                    x,
                    (0, d0, h0, w0, 0),
                    (N,
                     d0 + (OD - 1) * stride + 1,
                     h0 + (OH - 1) * stride + 1,
                     w0 + (OW - 1) * stride + 1,
                     C_in),
                    strides=(1, stride, stride, stride, 1))
                cols.append(sl)  # (N, OD, OH, OW, C_in)
    return jnp.concatenate(cols, axis=-1)


def phm_conv3d(x_ncdhw, A, Fp, bias, *, stride=1, padding=0, dilation=1,
               tile_m=512, tile_k=2048, out_dtype=jnp.float32):
    """PHMConv3d forward: y = conv3d(x, sum_i kron(A[i], F[i]), bias)."""
    n = A.shape[0]
    _, O, I, KD, KH, KW = Fp.shape
    C_out, C_in = n * O, n * I

    N, Cx, D, H, Wsp = x_ncdhw.shape
    assert Cx == C_in, (Cx, C_in)

    # ---- PHM weight assembly (parameter glue, plain JAX, f32) ---------------
    W_full = _phm_weight(A.astype(jnp.float32), Fp.astype(jnp.float32))
    # (C_out, C_in, KD, KH, KW) -> (KD, KH, KW, C_in, C_out) -> (K_eff, C_out)
    K_eff = KD * KH * KW * C_in
    W2 = jnp.transpose(W_full, (2, 3, 4, 1, 0)).reshape(K_eff, C_out)

    # ---- channels-last, bf16, explicit zero padding, im2col -----------------
    # Cast BEFORE im2col so the 27x patches intermediate is materialized in bf16
    # (halves the dominant HBM traffic of the op).
    x = jnp.transpose(x_ncdhw, (0, 2, 3, 4, 1)).astype(jnp.bfloat16)
    p = padding
    x = jnp.pad(x, ((0, 0), (p, p), (p, p), (p, p), (0, 0)))
    D_pad, H_pad, W_pad = D + 2 * p, H + 2 * p, Wsp + 2 * p

    OD = (D_pad - dilation * (KD - 1) - 1) // stride + 1
    OH = (H_pad - dilation * (KH - 1) - 1) // stride + 1
    OW = (W_pad - dilation * (KW - 1) - 1) // stride + 1

    patches = _im2col_ndhwc(x, KD, KH, KW, stride, dilation, OD, OH, OW)
    M_total = N * OD * OH * OW
    patches = patches.reshape(M_total, K_eff)

    # ---- lane/sublane friendly padding --------------------------------------
    # 256-multiple padding fills the 2x256x256 MXU on v6e/v7x; only applied when
    # the dim is already >= 128 so we never add pure zero-FLOPs (v5e unaffected).
    k_align = 256 if K_eff >= 128 else 128
    cout_align = 256 if C_out >= 128 else 128
    K_pad = _round_up(K_eff, k_align)
    Cout_pad = _round_up(C_out, cout_align)

    # K tiling: bound the resident-weight + patches VMEM footprint (v7x 64 MiB).
    tile_k = _round_up(tile_k, k_align)
    nk = pl.cdiv(K_pad, tile_k) if K_pad > tile_k else 1
    tk = _round_up(pl.cdiv(K_pad, nk), k_align)
    K_pad = tk * nk
    grid_k = nk

    # M tiling: multiples of 16 (bf16 (16,128) vreg packing); default 512 rows.
    tile_m = _round_up(tile_m, 16)
    tm = min(tile_m, _round_up(M_total, 16))
    # v7x has 2 TensorCores: keep >= 2 M tiles when there is enough real work.
    if _round_up(M_total, tm) // tm < 2 and M_total >= 32:
        tm = _round_up(pl.cdiv(M_total, 2), 16)
    M_pad = _round_up(M_total, tm)
    grid_m = M_pad // tm

    patches = jnp.pad(patches, ((0, M_pad - M_total), (0, K_pad - K_eff)))
    W2 = jnp.pad(W2, ((0, K_pad - K_eff), (0, Cout_pad - C_out))).astype(jnp.bfloat16)
    b = jnp.zeros((C_out,), jnp.float32) if bias is None else bias.astype(jnp.float32)
    b = jnp.pad(b, (0, Cout_pad - C_out)).reshape(1, Cout_pad)

    # ---- BlockSpecs ----------------------------------------------------------
    p_spec = pl.BlockSpec((tm, tk), lambda i, k: (i, k))
    if grid_k == 1:
        # Constant index_map -> single resident buffer (no dead double buffer).
        w_spec = pl.BlockSpec((tk, Cout_pad), lambda i, k: (k, 0),
                              pipeline_mode=pl.Buffered(1))
    else:
        w_spec = pl.BlockSpec((tk, Cout_pad), lambda i, k: (k, 0))
    b_spec = pl.BlockSpec((1, Cout_pad), lambda i, k: (0, 0),
                          pipeline_mode=pl.Buffered(1))
    o_spec = pl.BlockSpec((tm, Cout_pad), lambda i, k: (i, 0))

    out_bytes = 2 if out_dtype == jnp.bfloat16 else 4
    cost = pl.CostEstimate(
        flops=2 * M_pad * K_pad * Cout_pad,
        transcendentals=0,
        bytes_accessed=(M_pad * K_pad * 2 + grid_m * K_pad * Cout_pad * 2
                        + Cout_pad * 4 + M_pad * Cout_pad * out_bytes),
    )

    out = pl.pallas_call(
        _gemm_bias_kernel,
        out_shape=jax.ShapeDtypeStruct((M_pad, Cout_pad), out_dtype),
        grid_spec=pltpu.PrefetchScalarGridSpec(
            num_scalar_prefetch=0,
            grid=(grid_m, grid_k),
            in_specs=[p_spec, w_spec, b_spec],
            out_specs=o_spec,
            scratch_shapes=[pltpu.VMEM((tm, Cout_pad), jnp.float32)],
        ),
        compiler_params=pltpu.CompilerParams(
            dimension_semantics=("parallel", "arbitrary")),
        cost_estimate=cost,
    )(patches, W2, b)

    # strip padding, back to PyTorch NCDHW convention
    out = out[:M_total, :C_out].reshape(N, OD, OH, OW, C_out)
    return jnp.transpose(out, (0, 4, 1, 2, 3))


def _xavier_uniform(key, shape):
    fan_in = shape[1] * math.prod(shape[2:])
    fan_out = shape[0] * math.prod(shape[2:])
    bound = math.sqrt(6.0 / (fan_in + fan_out))
    return jax.random.uniform(key, shape, jnp.float32, -bound, bound)


if __name__ == "__main__":
    # Module hyper-params (small, consistent with PHMConv3d.__init__)
    n = 2
    in_features, out_features = 4, 8
    kernel_size = 3
    N, D, H, W = 2, 8, 8, 8

    key = jax.random.PRNGKey(0)
    kA, kF, kb, kx = jax.random.split(key, 4)

    A = _xavier_uniform(kA, (n, n, n))
    Fp = _xavier_uniform(kF, (n, out_features // n, in_features // n,
                              kernel_size, kernel_size, kernel_size))
    bound = 1.0 / math.sqrt(in_features)            # fan_in of zeros((out, in))
    bias = jax.random.uniform(kb, (out_features,), jnp.float32, -bound, bound)
    x = jax.random.normal(kx, (N, in_features, D, H, W), jnp.float32)

    # Reference operands with the same bf16 quantization the kernel applies
    # (products of bf16 values are exact in f32, so the comparison is tight).
    W_full = _phm_weight(A, Fp)
    W_bf = W_full.astype(jnp.bfloat16).astype(jnp.float32)
    x_bf = x.astype(jnp.bfloat16).astype(jnp.float32)

    for (stride, padding, dilation) in [(1, 1, 1), (2, 1, 1)]:
        conv_fn = jax.jit(functools.partial(
            phm_conv3d, stride=stride, padding=padding, dilation=dilation))
        out = jax.block_until_ready(conv_fn(x, A, Fp, bias))

        ref = lax.conv_general_dilated(
            x_bf, W_bf,
            window_strides=(stride,) * 3,
            padding=[(padding, padding)] * 3,
            rhs_dilation=(dilation,) * 3,
            dimension_numbers=("NCDHW", "OIDHW", "NCDHW"),
            precision=lax.Precision.HIGHEST,
        ) + bias[None, :, None, None, None]

        assert out.shape == ref.shape, (out.shape, ref.shape)
        err = float(jnp.max(jnp.abs(out - ref)))
        assert err < 1e-2, f"stride={stride} max abs err {err}"

        # looser sanity check against the pure-f32 reference (quantization only)
        ref_f32 = lax.conv_general_dilated(
            x, W_full,
            window_strides=(stride,) * 3,
            padding=[(padding, padding)] * 3,
            rhs_dilation=(dilation,) * 3,
            dimension_numbers=("NCDHW", "OIDHW", "NCDHW"),
            precision=lax.Precision.HIGHEST,
        ) + bias[None, :, None, None, None]
        err_f32 = float(jnp.max(jnp.abs(out - ref_f32)))
        assert err_f32 < 1.5e-1, f"stride={stride} max abs err vs f32 {err_f32}"

    print("KERNEL_OK")
</pallas_src>

<mosaic_0001>
module attributes {stable_mosaic.version = 11 : i64} {
  func.func @_gemm_bias_kernel(%arg0: i32, %arg1: i32, %arg2: memref<512x128xbf16, #tpu.memory_space<vmem>>, %arg3: memref<128x128xbf16, #tpu.memory_space<vmem>>, %arg4: memref<1x128xf32, #tpu.memory_space<vmem>>, %arg5: memref<512x128xf32, #tpu.memory_space<vmem>>, %arg6: memref<512x128xf32, #tpu.memory_space<vmem>>) attributes {dimension_semantics = [#tpu.dimension_semantics<parallel>, #tpu.dimension_semantics<arbitrary>], iteration_bounds = array<i64: 2, 1>, scalar_prefetch = 0 : i64, scratch_operands = 1 : i64, tpu.core_type = #tpu.core_type<tc>, window_params = [{transform_indices = @transform_0, window_bounds = array<i64: 512, 128>}, {pipeline_mode = #tpu.pipeline_mode<synchronous>, transform_indices = @transform_1, window_bounds = array<i64: 128, 128>}, {pipeline_mode = #tpu.pipeline_mode<synchronous>, transform_indices = @transform_2, window_bounds = array<i64: 1, 128>}, {transform_indices = @transform_3, window_bounds = array<i64: 512, 128>}]} {
    %c0_i32 = arith.constant 0 : i32
    %0 = arith.cmpi eq, %arg1, %c0_i32 : i32
    %1 = arith.extui %0 : i1 to i32
    %c0_i32_0 = arith.constant 0 : i32
    %2 = arith.cmpi ne, %1, %c0_i32_0 : i32
    scf.if %2 {
      %cst_10 = arith.constant 0.000000e+00 : f32
      %12 = vector.broadcast %cst_10 : f32 to vector<512x128xf32>
      %c0_11 = arith.constant 0 : index
      %c0_12 = arith.constant 0 : index
      %13 = vector.load %arg6[%c0_11, %c0_12] : memref<512x128xf32, #tpu.memory_space<vmem>>, vector<512x128xf32>
      tpu.vector_store %arg6[%c0_11, %c0_12], %12 {strides = array<i32>} : memref<512x128xf32, #tpu.memory_space<vmem>>, vector<512x128xf32>,
    } else {
    }
    %c0 = arith.constant 0 : index
    %c0_1 = arith.constant 0 : index
    %3 = vector.load %arg6[%c0, %c0_1] : memref<512x128xf32, #tpu.memory_space<vmem>>, vector<512x128xf32>
    %c0_2 = arith.constant 0 : index
    %c0_3 = arith.constant 0 : index
    %4 = vector.load %arg2[%c0_2, %c0_3] : memref<512x128xbf16, #tpu.memory_space<vmem>>, vector<512x128xbf16>
    %c0_4 = arith.constant 0 : index
    %c0_5 = arith.constant 0 : index
    %5 = vector.load %arg3[%c0_4, %c0_5] : memref<128x128xbf16, #tpu.memory_space<vmem>>, vector<128x128xbf16>
    %cst = arith.constant dense<0.000000e+00> : vector<512x128xf32>
    %6 = tpu.matmul %4, %5, %cst {dimension_numbers = #tpu.dot_dimension_numbers<[1], [0], [0], [1], [0, 0, 1, 1], [], []>} : vector<512x128xbf16>, vector<128x128xbf16>, vector<512x128xf32> -> vector<512x128xf32>
    %7 = arith.addf %3, %6 : vector<512x128xf32>
    %c0_6 = arith.constant 0 : index
    %c0_7 = arith.constant 0 : index
    %8 = vector.load %arg6[%c0_6, %c0_7] : memref<512x128xf32, #tpu.memory_space<vmem>>, vector<512x128xf32>
    tpu.vector_store %arg6[%c0_6, %c0_7], %7 {strides = array<i32>} : memref<512x128xf32, #tpu.memory_space<vmem>>, vector<512x128xf32>,
    %c0_i32_8 = arith.constant 0 : i32
    %9 = arith.cmpi eq, %arg1, %c0_i32_8 : i32
    %10 = arith.extui %9 : i1 to i32
    %c0_i32_9 = arith.constant 0 : i32
    %11 = arith.cmpi ne, %10, %c0_i32_9 : i32
    scf.if %11 {
      %c0_10 = arith.constant 0 : index
      %c0_11 = arith.constant 0 : index
      %12 = vector.load %arg6[%c0_10, %c0_11] : memref<512x128xf32, #tpu.memory_space<vmem>>, vector<512x128xf32>
      %c0_12 = arith.constant 0 : index
      %c0_13 = arith.constant 0 : index
      %13 = vector.load %arg4[%c0_12, %c0_13] : memref<1x128xf32, #tpu.memory_space<vmem>>, vector<1x128xf32>
      %14 = vector.broadcast %13 : vector<1x128xf32> to vector<512x128xf32>
      %15 = arith.addf %12, %14 : vector<512x128xf32>
      %c0_14 = arith.constant 0 : index
      %c0_15 = arith.constant 0 : index
      %16 = vector.load %arg5[%c0_14, %c0_15] : memref<512x128xf32, #tpu.memory_space<vmem>>, vector<512x128xf32>
      tpu.vector_store %arg5[%c0_14, %c0_15], %15 {strides = array<i32>} : memref<512x128xf32, #tpu.memory_space<vmem>>, vector<512x128xf32>,
    } else {
    }
    return
  }
  func.func @transform_0(%arg0: i32, %arg1: i32) -> (i32, i32) {
    %c0_i32 = arith.constant 0 : i32
    return %arg0, %arg1 : i32, i32
  }
  func.func @transform_1(%arg0: i32, %arg1: i32) -> (i32, i32) {
    %c0_i32 = arith.constant 0 : i32
    %c0_i32_0 = arith.constant 0 : i32
    return %arg1, %c0_i32 : i32, i32
  }
  func.func @transform_2(%arg0: i32, %arg1: i32) -> (i32, i32) {
    %c0_i32 = arith.constant 0 : i32
    %c0_i32_0 = arith.constant 0 : i32
    %c0_i32_1 = arith.constant 0 : i32
    return %c0_i32, %c0_i32_0 : i32, i32
  }
  func.func @transform_3(%arg0: i32, %arg1: i32) -> (i32, i32) {
    %c0_i32 = arith.constant 0 : i32
    %c0_i32_0 = arith.constant 0 : i32
    return %arg0, %c0_i32 : i32, i32
  }
}

</mosaic_0001>

<llo_original>
// kernel: phm_conv3d.1
$region0: #{phm_conv3d.1}
  #allocation0 [shape = 'u32[]', space=smem, size = 0x4, offset = 0x4, fixed_abs, tag = 'smem constant byte address 0x4 - core index']
  #allocation1 [shape = 'u32[144,128]{1,0:T(1,128)}', space=vmem, size = 0x12000, scoped, tag = 'internal scratch']
  #allocation2 [shape = 'f32[512,128]{1,0:T(8,128)}', space=vmem, size = 0x40000, scoped, tag = 'scratch operand']
  %s0 = inlined_call_operand.vmem [shape: bf16[1024,128], index: 0, kind: input, shape index: {}]
  %s1 = inlined_call_operand.vmem [shape: bf16[128,128], index: 1, kind: input, shape index: {}]
  %s2 = inlined_call_operand.vmem [shape: f32[1,128], index: 2, kind: input, shape index: {}]
  %s3 = inlined_call_operand.vmem [shape: f32[1024,128], index: 3, kind: output, shape index: {}]
  %s4 = sld [smem:[#allocation0]]
  $region53: #{phm_conv3d.1} parent=0
    _
  %s6 = ssub.s32 1, %s4
  %s7 = scalar_select 0, %s6, %s4
  loop: start=0, step=1, limit=4
  $region2: #{phm_conv3d.1} parent=0 // loop_pre_header
    _
  $region3: #{phm_conv3d.1} parent=0 // loop_header
    %s9 = sphi 0, %s13
    %p10 = scmp.ge.s32.totalorder %s9, 4
    %s16 = sphi 0, %s28
    %s17 = sphi 0, %s24
    %s18 = sphi 0, %s16
    %s19 = sphi 0, %s17
    %s20 = sphi 0, %s18
    %s21 = sphi 0, %s19
    %s33 = sphi 0, %s35
    %s36 = sphi 0, %s33
    %s37 = sphi 0, %s36
    %s53 = sphi 0, %s37
    %s59 = sphi 0, %s61
    %s62 = sphi 0, %s59
    %s63 = sphi 0, %s62
    %s79 = sphi 0, %s63
    %s83 = sphi 0, %s83
    %s85 = sphi 0, %s83
    %s86 = sphi 0, %s85
    %s100 = sphi 0, %s86
    %s106 = sphi 0, %s108
    %s109 = sphi 0, %s106
    %s110 = sphi 0, %s109
    %s126 = sphi 0, %s110
  $region4: #{phm_conv3d.1} parent=0 // loop_header_branch
    %12 = sbr.rel (%p10) target = $region8
  $region5: #{phm_conv3d.1} parent=0 // loop_body
    %s14 = ssub.s32 %s9, 1
    %s15 = ssub.s32 %s9, 2
    %s22 = sadd.s32 1, %s17
    %p23 = scmp.ge.s32.totalorder %s22, 1
    %s24 = scalar_select %p23, 0, %s22
    %s25 = sadd.s32 1, %s16
    %s26 = scalar_select %p23, %s25, %s16
    %p27 = scmp.ge.s32.totalorder %s26, 2
    %s28 = scalar_select %p27, 0, %s26
    %s29 = ssub.s32 %s16, %s28
    %s30 = ssub.s32 %s17, %s24
    %s31 = sor.u32 %s29, %s30
    %p32 = scmp.eq.s32.totalorder %s31, 0
    %s34 = sadd.s32 %s33, 1
    %s35 = scalar_select %p32, %s33, %s34
    %p38 = pneg %p32
    %p39 = scmp.eq.s32.totalorder %s9, 1
    %p40 = por %p38, %p39
    %p41 = scmp.ne.s32.totalorder %s33, %s36
    %p42 = scmp.eq.s32.totalorder %s9, 0
    %p43 = por %p41, %p42
    %p44 = scmp.ne.s32.totalorder %s33, %s36
    %p45 = scmp.eq.s32.totalorder %s14, 1
    %p46 = por %p44, %p45
    %p47 = scmp.ne.s32.totalorder %s36, %s37
    %p48 = scmp.eq.s32.totalorder %s14, 0
    %p49 = por %p47, %p48
    %p50 = scmp.ne.s32.totalorder %s36, %s37
    %p51 = scmp.eq.s32.totalorder %s15, 1
    %p52 = por %p50, %p51
    %p54 = scmp.ne.s32.totalorder %s37, %s53
    %p55 = scmp.eq.s32.totalorder %s15, 0
    %p56 = por %p54, %p55
    %s57 = ssub.s32 %s17, %s24
    %p58 = scmp.eq.s32.totalorder %s57, 0
    %s60 = sadd.s32 %s59, 1
    %s61 = scalar_select %p58, %s59, %s60
    %p64 = pneg %p58
    %p65 = scmp.eq.s32.totalorder %s9, 1
    %p66 = por %p64, %p65
    %p67 = scmp.ne.s32.totalorder %s59, %s62
    %p68 = scmp.eq.s32.totalorder %s9, 0
    %p69 = por %p67, %p68
    %p70 = scmp.ne.s32.totalorder %s59, %s62
    %p71 = scmp.eq.s32.totalorder %s14, 1
    %p72 = por %p70, %p71
    %p73 = scmp.ne.s32.totalorder %s62, %s63
    %p74 = scmp.eq.s32.totalorder %s14, 0
    %p75 = por %p73, %p74
    %p76 = scmp.ne.s32.totalorder %s62, %s63
    %p77 = scmp.eq.s32.totalorder %s15, 1
    %p78 = por %p76, %p77
    %p80 = scmp.ne.s32.totalorder %s63, %s79
    %p81 = scmp.eq.s32.totalorder %s15, 0
    %p82 = por %p80, %p81
    %s84 = sadd.s32 %s83, 1
    %p87 = scmp.eq.s32.totalorder %s9, 1
    %p88 = scmp.ne.s32.totalorder %s83, %s85
    %p89 = scmp.eq.s32.totalorder %s9, 0
    %p90 = por %p88, %p89
    %p91 = scmp.ne.s32.totalorder %s83, %s85
    %p92 = scmp.eq.s32.totalorder %s14, 1
    %p93 = por %p91, %p92
    %p94 = scmp.ne.s32.totalorder %s85, %s86
    %p95 = scmp.eq.s32.totalorder %s14, 0
    %p96 = por %p94, %p95
    %p97 = scmp.ne.s32.totalorder %s85, %s86
    %p98 = scmp.eq.s32.totalorder %s15, 1
    %p99 = por %p97, %p98
    %p101 = scmp.ne.s32.totalorder %s86, %s100
    %p102 = scmp.eq.s32.totalorder %s15, 0
    %p103 = por %p101, %p102
    %s104 = ssub.s32 %s16, %s28
    %p105 = scmp.eq.s32.totalorder %s104, 0
    %s107 = sadd.s32 %s106, 1
    %s108 = scalar_select %p105, %s106, %s107
    %p111 = pneg %p105
    %p112 = scmp.eq.s32.totalorder %s9, 1
    %p113 = por %p111, %p112
    %p114 = scmp.ne.s32.totalorder %s106, %s109
    %p115 = scmp.eq.s32.totalorder %s9, 0
    %p116 = por %p114, %p115
    %p117 = scmp.ne.s32.totalorder %s106, %s109
    %p118 = scmp.eq.s32.totalorder %s14, 1
    %p119 = por %p117, %p118
    %p120 = scmp.ne.s32.totalorder %s109, %s110
    %p121 = scmp.eq.s32.totalorder %s14, 0
    %p122 = por %p120, %p121
    %p123 = scmp.ne.s32.totalorder %s109, %s110
    %p124 = scmp.eq.s32.totalorder %s15, 1
    %p125 = por %p123, %p124
    %p127 = scmp.ne.s32.totalorder %s110, %s126
    %p128 = scmp.eq.s32.totalorder %s15, 0
    %p129 = por %p127, %p128
    %p130 = scmp.le.s32.totalorder 1, %s9
    %p131 = scmp.lt.s32.totalorder %s9, 3
    %p132 = pnand %p130, %p131
    %p133 = pneg %p132
    // Predicated region
    $region9: #{phm_conv3d.1} parent=5 // pred_check
      _
    $region10: #{phm_conv3d.1} parent=5 // pred_check_branch
      %135 = sbr.rel (%p132) target = $region12
    $region11: #{phm_conv3d.1} parent=5 // pred_region
      %s136 = ssub.s32 %s9, 1
      // Predicated region
      $region13: #{phm_conv3d.1} parent=11 // pred_check
        %p137 = pneg %p75
      $region14: #{phm_conv3d.1} parent=11 // pred_check_branch
        %139 = sbr.rel (%p137) target = $region16
      $region15: #{phm_conv3d.1} parent=11 // pred_region
        %s140 = smul.u32 16, %s19
        %p141 = scmp.lt.s32.totalorder %s140, 15
        %s142 = scalar_select %p141, %s140, 15
        %s143 = smul.addr %s142, 4
        %s144 = scalar_lea.vmem %s1, %s143
        %s145 = smul.u32 16, %s19
      $region16: #{phm_conv3d.1} parent=11 // pred_fallthru
        _
      // Predicated region
      $region17: #{phm_conv3d.1} parent=11 // pred_check
        %p146 = pneg %p96
      $region18: #{phm_conv3d.1} parent=11 // pred_check_branch
        %148 = sbr.rel (%p146) target = $region20
      $region19: #{phm_conv3d.1} parent=11 // pred_region
        _
      $region20: #{phm_conv3d.1} parent=11 // pred_fallthru
        _
    $region12: #{phm_conv3d.1} parent=5 // pred_fallthru
      _
    %p149 = scmp.lt.s32.totalorder %s9, 2
    // Predicated region
    $region21: #{phm_conv3d.1} parent=5 // pred_check
      %p150 = pneg %p149
    $region22: #{phm_conv3d.1} parent=5 // pred_check_branch
      %152 = sbr.rel (%p150) target = $region24
    $region23: #{phm_conv3d.1} parent=5 // pred_region
      // Predicated region
      $region25: #{phm_conv3d.1} parent=23 // pred_check
        %p153 = pneg %p43
      $region26: #{phm_conv3d.1} parent=23 // pred_check_branch
        %155 = sbr.rel (%p153) target = $region28
      $region27: #{phm_conv3d.1} parent=23 // pred_region
        %s156 = smul.u32 64, %s16
        %p157 = scmp.lt.s32.totalorder %s156, 127
        %s158 = scalar_select %p157, %s156, 127
        %p159 = scmp.lt.s32.totalorder %s17, 0
        %s160 = scalar_select %p159, %s17, 0
        %s161 = sadd.s32 %s160, %s158
        %s162 = smul.addr %s161, 4
        %s163 = scalar_lea.vmem %s0, %s162
        %s164 = smul.u32 64, %s16
      $region28: #{phm_conv3d.1} parent=23 // pred_fallthru
        _
    $region24: #{phm_conv3d.1} parent=5 // pred_fallthru
      _
    %p165 = scmp.le.s32.totalorder 1, %s9
    %p166 = scmp.lt.s32.totalorder %s9, 3
    %p167 = pnand %p165, %p166
    %p168 = pneg %p167
    // Predicated region
    $region29: #{phm_conv3d.1} parent=5 // pred_check
      _
    $region30: #{phm_conv3d.1} parent=5 // pred_check_branch
      %170 = sbr.rel (%p167) target = $region32
    $region31: #{phm_conv3d.1} parent=5 // pred_region
      %s171 = ssub.s32 %s9, 1
      %s172 = smul.u32 64, %s18
      %p173 = scmp.lt.s32.totalorder %s172, 127
      %s174 = scalar_select %p173, %s172, 127
      %p175 = scmp.lt.s32.totalorder %s19, 0
      %s176 = scalar_select %p175, %s19, 0
      %s177 = sadd.s32 %s176, %s174
      %s178 = smul.addr %s177, 4
      %s179 = scalar_lea.vmem %s0, %s178
      %p180 = pneg %p49
      %p181 = pneg %p46
      %s182 = smul.u32 16, %s19
      %p183 = scmp.lt.s32.totalorder %s182, 15
      %s184 = scalar_select %p183, %s182, 15
      %s185 = smul.addr %s184, 4
      %s186 = scalar_lea.vmem %s1, %s185
      %p187 = pneg %p75
      %p188 = pneg %p72
      %p189 = pneg %p96
      %p190 = pneg %p93
      %p191 = pneg %p122
      %p192 = pneg %p119
      %s193 = smul.u32 64, %s18
      %p194 = scmp.lt.s32.totalorder %s193, 127
      %s195 = scalar_select %p194, %s193, 127
      %s196 = smul.addr %s195, 8
      %s197 = scalar_lea.vmem %s3, %s196
      %s198 = smul.u32 64, %s18
      %p199 = scmp.lt.s32.totalorder %s198, 127
      %s200 = scalar_select %p199, %s198, 127
      %p201 = scmp.lt.s32.totalorder %s19, 0
      %s202 = scalar_select %p201, %s19, 0
      %s203 = sadd.s32 %s202, %s200
      %s204 = smul.addr %s203, 4
      %s205 = scalar_lea.vmem %s0, %s204
      %s206 = smul.u32 64, %s18
      %s207 = smul.u32 16, %s19
      %p208 = scmp.lt.s32.totalorder %s207, 15
      %s209 = scalar_select %p208, %s207, 15
      %s210 = smul.addr %s209, 4
      %s211 = scalar_lea.vmem %s1, %s210
      %s212 = smul.u32 16, %s19
      %s213 = smul.u32 64, %s18
      %p214 = scmp.lt.s32.totalorder %s213, 127
      %s215 = scalar_select %p214, %s213, 127
      %s216 = smul.addr %s215, 8
      %s217 = scalar_lea.vmem %s3, %s216
      %s218 = smul.u32 64, %s18
      %p220 = scmp.eq.s32.totalorder %s19, 0
      // Predicated region
      $region33: #{phm_conv3d.1} parent=31 // pred_check
        %p221 = pneg %p220
      $region34: #{phm_conv3d.1} parent=31 // pred_check_branch
        %223 = sbr.rel (%p221) target = $region36
      $region35: #{phm_conv3d.1} parent=31 // pred_region
        %224 = vst [vmem:[#allocation2] sm:$0xff] 0.0
        %225 = vst [vmem:[#allocation2 + $0x8] sm:$0xff] 0.0
        %226 = vst [vmem:[#allocation2 + $0x10] sm:$0xff] 0.0
        %227 = vst [vmem:[#allocation2 + $0x18] sm:$0xff] 0.0
        %228 = vst [vmem:[#allocation2 + $0x20] sm:$0xff] 0.0
        %229 = vst [vmem:[#allocation2 + $0x28] sm:$0xff] 0.0
        %230 = vst [vmem:[#allocation2 + $0x30] sm:$0xff] 0.0
        %231 = vst [vmem:[#allocation2 + $0x38] sm:$0xff] 0.0
        %232 = vst [vmem:[#allocation2 + $0x40] sm:$0xff] 0.0
        %233 = vst [vmem:[#allocation2 + $0x48] sm:$0xff] 0.0
        %234 = vst [vmem:[#allocation2 + $0x50] sm:$0xff] 0.0
        %235 = vst [vmem:[#allocation2 + $0x58] sm:$0xff] 0.0
        %236 = vst [vmem:[#allocation2 + $0x60] sm:$0xff] 0.0
        %237 = vst [vmem:[#allocation2 + $0x68] sm:$0xff] 0.0
        %238 = vst [vmem:[#allocation2 + $0x70] sm:$0xff] 0.0
        %239 = vst [vmem:[#allocation2 + $0x78] sm:$0xff] 0.0
        %240 = vst [vmem:[#allocation2 + $0x80] sm:$0xff] 0.0
        %241 = vst [vmem:[#allocation2 + $0x88] sm:$0xff] 0.0
        %242 = vst [vmem:[#allocation2 + $0x90] sm:$0xff] 0.0
        %243 = vst [vmem:[#allocation2 + $0x98] sm:$0xff] 0.0
        %244 = vst [vmem:[#allocation2 + $0xa0] sm:$0xff] 0.0
        %245 = vst [vmem:[#allocation2 + $0xa8] sm:$0xff] 0.0
        %246 = vst [vmem:[#allocation2 + $0xb0] sm:$0xff] 0.0
        %247 = vst [vmem:[#allocation2 + $0xb8] sm:$0xff] 0.0
        %248 = vst [vmem:[#allocation2 + $0xc0] sm:$0xff] 0.0
        %249 = vst [vmem:[#allocation2 + $0xc8] sm:$0xff] 0.0
        %250 = vst [vmem:[#allocation2 + $0xd0] sm:$0xff] 0.0
        %251 = vst [vmem:[#allocation2 + $0xd8] sm:$0xff] 0.0
        %252 = vst [vmem:[#allocation2 + $0xe0] sm:$0xff] 0.0
        %253 = vst [vmem:[#allocation2 + $0xe8] sm:$0xff] 0.0
        %254 = vst [vmem:[#allocation2 + $0xf0] sm:$0xff] 0.0
        %255 = vst [vmem:[#allocation2 + $0xf8] sm:$0xff] 0.0
        %256 = vst [vmem:[#allocation2 + $0x100] sm:$0xff] 0.0
        %257 = vst [vmem:[#allocation2 + $0x108] sm:$0xff] 0.0
        %258 = vst [vmem:[#allocation2 + $0x110] sm:$0xff] 0.0
        %259 = vst [vmem:[#allocation2 + $0x118] sm:$0xff] 0.0
        %260 = vst [vmem:[#allocation2 + $0x120] sm:$0xff] 0.0
        %261 = vst [vmem:[#allocation2 + $0x128] sm:$0xff] 0.0
        %262 = vst [vmem:[#allocation2 + $0x130] sm:$0xff] 0.0
        %263 = vst [vmem:[#allocation2 + $0x138] sm:$0xff] 0.0
        %264 = vst [vmem:[#allocation2 + $0x140] sm:$0xff] 0.0
        %265 = vst [vmem:[#allocation2 + $0x148] sm:$0xff] 0.0
        %266 = vst [vmem:[#allocation2 + $0x150] sm:$0xff] 0.0
        %267 = vst [vmem:[#allocation2 + $0x158] sm:$0xff] 0.0
        %268 = vst [vmem:[#allocation2 + $0x160] sm:$0xff] 0.0
        %269 = vst [vmem:[#allocation2 + $0x168] sm:$0xff] 0.0
        %270 = vst [vmem:[#allocation2 + $0x170] sm:$0xff] 0.0
        %271 = vst [vmem:[#allocation2 + $0x178] sm:$0xff] 0.0
        %272 = vst [vmem:[#allocation2 + $0x180] sm:$0xff] 0.0
        %273 = vst [vmem:[#allocation2 + $0x188] sm:$0xff] 0.0
        %274 = vst [vmem:[#allocation2 + $0x190] sm:$0xff] 0.0
        %275 = vst [vmem:[#allocation2 + $0x198] sm:$0xff] 0.0
        %276 = vst [vmem:[#allocation2 + $0x1a0] sm:$0xff] 0.0
        %277 = vst [vmem:[#allocation2 + $0x1a8] sm:$0xff] 0.0
        %278 = vst [vmem:[#allocation2 + $0x1b0] sm:$0xff] 0.0
        %279 = vst [vmem:[#allocation2 + $0x1b8] sm:$0xff] 0.0
        %280 = vst [vmem:[#allocation2 + $0x1c0] sm:$0xff] 0.0
        %281 = vst [vmem:[#allocation2 + $0x1c8] sm:$0xff] 0.0
        %282 = vst [vmem:[#allocation2 + $0x1d0] sm:$0xff] 0.0
        %283 = vst [vmem:[#allocation2 + $0x1d8] sm:$0xff] 0.0
        %284 = vst [vmem:[#allocation2 + $0x1e0] sm:$0xff] 0.0
        %285 = vst [vmem:[#allocation2 + $0x1e8] sm:$0xff] 0.0
        %286 = vst [vmem:[#allocation2 + $0x1f0] sm:$0xff] 0.0
        %287 = vst [vmem:[#allocation2 + $0x1f8] sm:$0xff] 0.0
      $region36: #{phm_conv3d.1} parent=31 // pred_fallthru
        _
      %v288 = vld [vmem:[#allocation2] sm:$0xff]
      %v289 = vld [vmem:[#allocation2 + $0x8] sm:$0xff]
      %v290 = vld [vmem:[#allocation2 + $0x10] sm:$0xff]
      %v291 = vld [vmem:[#allocation2 + $0x18] sm:$0xff]
      %v292 = vld [vmem:[#allocation2 + $0x20] sm:$0xff]
      %v293 = vld [vmem:[#allocation2 + $0x28] sm:$0xff]
      %v294 = vld [vmem:[#allocation2 + $0x30] sm:$0xff]
      %v295 = vld [vmem:[#allocation2 + $0x38] sm:$0xff]
      %v296 = vld [vmem:[#allocation2 + $0x40] sm:$0xff]
      %v297 = vld [vmem:[#allocation2 + $0x48] sm:$0xff]
      %v298 = vld [vmem:[#allocation2 + $0x50] sm:$0xff]
      %v299 = vld [vmem:[#allocation2 + $0x58] sm:$0xff]
      %v300 = vld [vmem:[#allocation2 + $0x60] sm:$0xff]
      %v301 = vld [vmem:[#allocation2 + $0x68] sm:$0xff]
      %v302 = vld [vmem:[#allocation2 + $0x70] sm:$0xff]
      %v303 = vld [vmem:[#allocation2 + $0x78] sm:$0xff]
      %v304 = vld [vmem:[#allocation2 + $0x80] sm:$0xff]
      %v305 = vld [vmem:[#allocation2 + $0x88] sm:$0xff]
      %v306 = vld [vmem:[#allocation2 + $0x90] sm:$0xff]
      %v307 = vld [vmem:[#allocation2 + $0x98] sm:$0xff]
      %v308 = vld [vmem:[#allocation2 + $0xa0] sm:$0xff]
      %v309 = vld [vmem:[#allocation2 + $0xa8] sm:$0xff]
      %v310 = vld [vmem:[#allocation2 + $0xb0] sm:$0xff]
      %v311 = vld [vmem:[#allocation2 + $0xb8] sm:$0xff]
      %v312 = vld [vmem:[#allocation2 + $0xc0] sm:$0xff]
      %v313 = vld [vmem:[#allocation2 + $0xc8] sm:$0xff]
      %v314 = vld [vmem:[#allocation2 + $0xd0] sm:$0xff]
      %v315 = vld [vmem:[#allocation2 + $0xd8] sm:$0xff]
      %v316 = vld [vmem:[#allocation2 + $0xe0] sm:$0xff]
      %v317 = vld [vmem:[#allocation2 + $0xe8] sm:$0xff]
      %v318 = vld [vmem:[#allocation2 + $0xf0] sm:$0xff]
      %v319 = vld [vmem:[#allocation2 + $0xf8] sm:$0xff]
      %v320 = vld [vmem:[#allocation2 + $0x100] sm:$0xff]
      %v321 = vld [vmem:[#allocation2 + $0x108] sm:$0xff]
      %v322 = vld [vmem:[#allocation2 + $0x110] sm:$0xff]
      %v323 = vld [vmem:[#allocation2 + $0x118] sm:$0xff]
      %v324 = vld [vmem:[#allocation2 + $0x120] sm:$0xff]
      %v325 = vld [vmem:[#allocation2 + $0x128] sm:$0xff]
      %v326 = vld [vmem:[#allocation2 + $0x130] sm:$0xff]
      %v327 = vld [vmem:[#allocation2 + $0x138] sm:$0xff]
      %v328 = vld [vmem:[#allocation2 + $0x140] sm:$0xff]
      %v329 = vld [vmem:[#allocation2 + $0x148] sm:$0xff]
      %v330 = vld [vmem:[#allocation2 + $0x150] sm:$0xff]
      %v331 = vld [vmem:[#allocation2 + $0x158] sm:$0xff]
      %v332 = vld [vmem:[#allocation2 + $0x160] sm:$0xff]
      %v333 = vld [vmem:[#allocation2 + $0x168] sm:$0xff]
      %v334 = vld [vmem:[#allocation2 + $0x170] sm:$0xff]
      %v335 = vld [vmem:[#allocation2 + $0x178] sm:$0xff]
      %v336 = vld [vmem:[#allocation2 + $0x180] sm:$0xff]
      %v337 = vld [vmem:[#allocation2 + $0x188] sm:$0xff]
      %v338 = vld [vmem:[#allocation2 + $0x190] sm:$0xff]
      %v339 = vld [vmem:[#allocation2 + $0x198] sm:$0xff]
      %v340 = vld [vmem:[#allocation2 + $0x1a0] sm:$0xff]
      %v341 = vld [vmem:[#allocation2 + $0x1a8] sm:$0xff]
      %v342 = vld [vmem:[#allocation2 + $0x1b0] sm:$0xff]
      %v343 = vld [vmem:[#allocation2 + $0x1b8] sm:$0xff]
      %v344 = vld [vmem:[#allocation2 + $0x1c0] sm:$0xff]
      %v345 = vld [vmem:[#allocation2 + $0x1c8] sm:$0xff]
      %v346 = vld [vmem:[#allocation2 + $0x1d0] sm:$0xff]
      %v347 = vld [vmem:[#allocation2 + $0x1d8] sm:$0xff]
      %v348 = vld [vmem:[#allocation2 + $0x1e0] sm:$0xff]
      %v349 = vld [vmem:[#allocation2 + $0x1e8] sm:$0xff]
      %v350 = vld [vmem:[#allocation2 + $0x1f0] sm:$0xff]
      %v351 = vld [vmem:[#allocation2 + $0x1f8] sm:$0xff]
      %v352 = vld [vmem:[%s205] sm:$0xf]
      %v353 = vld [vmem:[%s205 + $0x4] sm:$0xf]
      %v354 = vld [vmem:[%s205 + $0x8] sm:$0xf]
      %v355 = vld [vmem:[%s205 + $0xc] sm:$0xf]
      %v356 = vld [vmem:[%s205 + $0x10] sm:$0xf]
      %v357 = vld [vmem:[%s205 + $0x14] sm:$0xf]
      %v358 = vld [vmem:[%s205 + $0x18] sm:$0xf]
      %v359 = vld [vmem:[%s205 + $0x1c] sm:$0xf]
      %v360 = vld [vmem:[%s205 + $0x20] sm:$0xf]
      %v361 = vld [vmem:[%s205 + $0x24] sm:$0xf]
      %v362 = vld [vmem:[%s205 + $0x28] sm:$0xf]
      %v363 = vld [vmem:[%s205 + $0x2c] sm:$0xf]
      %v364 = vld [vmem:[%s205 + $0x30] sm:$0xf]
      %v365 = vld [vmem:[%s205 + $0x34] sm:$0xf]
      %v366 = vld [vmem:[%s205 + $0x38] sm:$0xf]
      %v367 = vld [vmem:[%s205 + $0x3c] sm:$0xf]
      %v368 = vld [vmem:[%s205 + $0x40] sm:$0xf]
      %v369 = vld [vmem:[%s205 + $0x44] sm:$0xf]
      %v370 = vld [vmem:[%s205 + $0x48] sm:$0xf]
      %v371 = vld [vmem:[%s205 + $0x4c] sm:$0xf]
      %v372 = vld [vmem:[%s205 + $0x50] sm:$0xf]
      %v373 = vld [vmem:[%s205 + $0x54] sm:$0xf]
      %v374 = vld [vmem:[%s205 + $0x58] sm:$0xf]
      %v375 = vld [vmem:[%s205 + $0x5c] sm:$0xf]
      %v376 = vld [vmem:[%s205 + $0x60] sm:$0xf]
      %v377 = vld [vmem:[%s205 + $0x64] sm:$0xf]
      %v378 = vld [vmem:[%s205 + $0x68] sm:$0xf]
      %v379 = vld [vmem:[%s205 + $0x6c] sm:$0xf]
      %v380 = vld [vmem:[%s205 + $0x70] sm:$0xf]
      %v381 = vld [vmem:[%s205 + $0x74] sm:$0xf]
      %v382 = vld [vmem:[%s205 + $0x78] sm:$0xf]
      %v383 = vld [vmem:[%s205 + $0x7c] sm:$0xf]
      %v384 = vld [vmem:[%s205 + $0x80] sm:$0xf]
      %v385 = vld [vmem:[%s205 + $0x84] sm:$0xf]
      %v386 = vld [vmem:[%s205 + $0x88] sm:$0xf]
      %v387 = vld [vmem:[%s205 + $0x8c] sm:$0xf]
      %v388 = vld [vmem:[%s205 + $0x90] sm:$0xf]
      %v389 = vld [vmem:[%s205 + $0x94] sm:$0xf]
      %v390 = vld [vmem:[%s205 + $0x98] sm:$0xf]
      %v391 = vld [vmem:[%s205 + $0x9c] sm:$0xf]
      %v392 = vld [vmem:[%s205 + $0xa0] sm:$0xf]
      %v393 = vld [vmem:[%s205 + $0xa4] sm:$0xf]
      %v394 = vld [vmem:[%s205 + $0xa8] sm:$0xf]
      %v395 = vld [vmem:[%s205 + $0xac] sm:$0xf]
      %v396 = vld [vmem:[%s205 + $0xb0] sm:$0xf]
      %v397 = vld [vmem:[%s205 + $0xb4] sm:$0xf]
      %v398 = vld [vmem:[%s205 + $0xb8] sm:$0xf]
      %v399 = vld [vmem:[%s205 + $0xbc] sm:$0xf]
      %v400 = vld [vmem:[%s205 + $0xc0] sm:$0xf]
      %v401 = vld [vmem:[%s205 + $0xc4] sm:$0xf]
      %v402 = vld [vmem:[%s205 + $0xc8] sm:$0xf]
      %v403 = vld [vmem:[%s205 + $0xcc] sm:$0xf]
      %v404 = vld [vmem:[%s205 + $0xd0] sm:$0xf]
      %v405 = vld [vmem:[%s205 + $0xd4] sm:$0xf]
      %v406 = vld [vmem:[%s205 + $0xd8] sm:$0xf]
      %v407 = vld [vmem:[%s205 + $0xdc] sm:$0xf]
      %v408 = vld [vmem:[%s205 + $0xe0] sm:$0xf]
      %v409 = vld [vmem:[%s205 + $0xe4] sm:$0xf]
      %v410 = vld [vmem:[%s205 + $0xe8] sm:$0xf]
      %v411 = vld [vmem:[%s205 + $0xec] sm:$0xf]
      %v412 = vld [vmem:[%s205 + $0xf0] sm:$0xf]
      %v413 = vld [vmem:[%s205 + $0xf4] sm:$0xf]
      %v414 = vld [vmem:[%s205 + $0xf8] sm:$0xf]
      %v415 = vld [vmem:[%s205 + $0xfc] sm:$0xf]
      %v416 = vld [vmem:[%s211] sm:$0xf]
      %v417 = vld [vmem:[%s211 + $0x4] sm:$0xf]
      %v418 = vld [vmem:[%s211 + $0x8] sm:$0xf]
      %v419 = vld [vmem:[%s211 + $0xc] sm:$0xf]
      %v420 = vld [vmem:[%s211 + $0x10] sm:$0xf]
      %v421 = vld [vmem:[%s211 + $0x14] sm:$0xf]
      %v422 = vld [vmem:[%s211 + $0x18] sm:$0xf]
      %v423 = vld [vmem:[%s211 + $0x1c] sm:$0xf]
      %v424 = vld [vmem:[%s211 + $0x20] sm:$0xf]
      %v425 = vld [vmem:[%s211 + $0x24] sm:$0xf]
      %v426 = vld [vmem:[%s211 + $0x28] sm:$0xf]
      %v427 = vld [vmem:[%s211 + $0x2c] sm:$0xf]
      %v428 = vld [vmem:[%s211 + $0x30] sm:$0xf]
      %v429 = vld [vmem:[%s211 + $0x34] sm:$0xf]
      %v430 = vld [vmem:[%s211 + $0x38] sm:$0xf]
      %v431 = vld [vmem:[%s211 + $0x3c] sm:$0xf]
      %v496 = vunpack.c.l.b16 %v352
      %v497 = vunpack.c.l.b16 %v353
      %v498 = vunpack.c.l.b16 %v354
      %v499 = vunpack.c.l.b16 %v355
      %v500 = vunpack.c.l.b16 %v356
      %v501 = vunpack.c.l.b16 %v357
      %v502 = vunpack.c.l.b16 %v358
      %v503 = vunpack.c.l.b16 %v359
      %v504 = vunpack.c.l.b16 %v360
      %v505 = vunpack.c.l.b16 %v361
      %v506 = vunpack.c.l.b16 %v362
      %v507 = vunpack.c.l.b16 %v363
      %v508 = vunpack.c.l.b16 %v364
      %v509 = vunpack.c.l.b16 %v365
      %v510 = vunpack.c.l.b16 %v366
      %v511 = vunpack.c.l.b16 %v367
      %v512 = vunpack.c.l.b16 %v368
      %v513 = vunpack.c.l.b16 %v369
      %v514 = vunpack.c.l.b16 %v370
      %v515 = vunpack.c.l.b16 %v371
      %v516 = vunpack.c.l.b16 %v372
      %v517 = vunpack.c.l.b16 %v373
      %v518 = vunpack.c.l.b16 %v374
      %v519 = vunpack.c.l.b16 %v375
      %v520 = vunpack.c.l.b16 %v376
      %v521 = vunpack.c.l.b16 %v377
      %v522 = vunpack.c.l.b16 %v378
      %v523 = vunpack.c.l.b16 %v379
      %v524 = vunpack.c.l.b16 %v380
      %v525 = vunpack.c.l.b16 %v381
      %v526 = vunpack.c.l.b16 %v382
      %v527 = vunpack.c.l.b16 %v383
      %v528 = vunpack.c.l.b16 %v384
      %v529 = vunpack.c.l.b16 %v385
      %v530 = vunpack.c.l.b16 %v386
      %v531 = vunpack.c.l.b16 %v387
      %v532 = vunpack.c.l.b16 %v388
      %v533 = vunpack.c.l.b16 %v389
      %v534 = vunpack.c.l.b16 %v390
      %v535 = vunpack.c.l.b16 %v391
      %v536 = vunpack.c.l.b16 %v392
      %v537 = vunpack.c.l.b16 %v393
      %v538 = vunpack.c.l.b16 %v394
      %v539 = vunpack.c.l.b16 %v395
      %v540 = vunpack.c.l.b16 %v396
      %v541 = vunpack.c.l.b16 %v397
      %v542 = vunpack.c.l.b16 %v398
      %v543 = vunpack.c.l.b16 %v399
      %v544 = vunpack.c.l.b16 %v400
      %v545 = vunpack.c.l.b16 %v401
      %v546 = vunpack.c.l.b16 %v402
      %v547 = vunpack.c.l.b16 %v403
      %v548 = vunpack.c.l.b16 %v404
      %v549 = vunpack.c.l.b16 %v405
      %v550 = vunpack.c.l.b16 %v406
      %v551 = vunpack.c.l.b16 %v407
      %v552 = vunpack.c.l.b16 %v408
      %v553 = vunpack.c.l.b16 %v409
      %v554 = vunpack.c.l.b16 %v410
      %v555 = vunpack.c.l.b16 %v411
      %v556 = vunpack.c.l.b16 %v412
      %v557 = vunpack.c.l.b16 %v413
      %v558 = vunpack.c.l.b16 %v414
      %v559 = vunpack.c.l.b16 %v415
      %v560 = vpack.c.b16 %v497, %v496
      %v561 = vpack.c.b16 %v499, %v498
      %v562 = vpack.c.b16 %v501, %v500
      %v563 = vpack.c.b16 %v503, %v502
      %v564 = vpack.c.b16 %v505, %v504
      %v565 = vpack.c.b16 %v507, %v506
      %v566 = vpack.c.b16 %v509, %v508
      %v567 = vpack.c.b16 %v511, %v510
      %v568 = vpack.c.b16 %v513, %v512
      %v569 = vpack.c.b16 %v515, %v514
      %v570 = vpack.c.b16 %v517, %v516
      %v571 = vpack.c.b16 %v519, %v518
      %v572 = vpack.c.b16 %v521, %v520
      %v573 = vpack.c.b16 %v523, %v522
      %v574 = vpack.c.b16 %v525, %v524
      %v575 = vpack.c.b16 %v527, %v526
      %v576 = vpack.c.b16 %v529, %v528
      %v577 = vpack.c.b16 %v531, %v530
      %v578 = vpack.c.b16 %v533, %v532
      %v579 = vpack.c.b16 %v535, %v534
      %v580 = vpack.c.b16 %v537, %v536
      %v581 = vpack.c.b16 %v539, %v538
      %v582 = vpack.c.b16 %v541, %v540
      %v583 = vpack.c.b16 %v543, %v542
      %v584 = vpack.c.b16 %v545, %v544
      %v585 = vpack.c.b16 %v547, %v546
      %v586 = vpack.c.b16 %v549, %v548
      %v587 = vpack.c.b16 %v551, %v550
      %v588 = vpack.c.b16 %v553, %v552
      %v589 = vpack.c.b16 %v555, %v554
      %v590 = vpack.c.b16 %v557, %v556
      %v591 = vpack.c.b16 %v559, %v558
      %v640 = vunpack.c.l.b16 %v416
      %v641 = vunpack.c.l.b16 %v417
      %v642 = vunpack.c.l.b16 %v418
      %v643 = vunpack.c.l.b16 %v419
      %v644 = vunpack.c.l.b16 %v420
      %v645 = vunpack.c.l.b16 %v421
      %v646 = vunpack.c.l.b16 %v422
      %v647 = vunpack.c.l.b16 %v423
      %v648 = vunpack.c.l.b16 %v424
      %v649 = vunpack.c.l.b16 %v425
      %v650 = vunpack.c.l.b16 %v426
      %v651 = vunpack.c.l.b16 %v427
      %v652 = vunpack.c.l.b16 %v428
      %v653 = vunpack.c.l.b16 %v429
      %v654 = vunpack.c.l.b16 %v430
      %v655 = vunpack.c.l.b16 %v431
      %v656 = vpack.c.b16 %v641, %v640
      %v657 = vpack.c.b16 %v643, %v642
      %v658 = vpack.c.b16 %v645, %v644
      %v659 = vpack.c.b16 %v647, %v646
      %v660 = vpack.c.b16 %v649, %v648
      %v661 = vpack.c.b16 %v651, %v650
      %v662 = vpack.c.b16 %v653, %v652
      %v663 = vpack.c.b16 %v655, %v654
      %672 = vmatprep.subr.bf16.mxu0 0
      %673 = vmatpush1.bf16.msra.mxu0 %v663
      %674 = vmatprep.subr.bf16.mxu0 0
      %675 = vmatpush1.bf16.msra.mxu0 %v662
      %676 = vmatprep.subr.bf16.mxu0 0
      %677 = vmatpush1.bf16.msra.mxu0 %v661
      %678 = vmatprep.subr.bf16.mxu0 0
      %679 = vmatpush1.bf16.msra.mxu0 %v660
      %680 = vmatprep.subr.bf16.mxu0 0
      %681 = vmatpush1.bf16.msra.mxu0 %v659
      %682 = vmatprep.subr.bf16.mxu0 0
      %683 = vmatpush1.bf16.msra.mxu0 %v658
      %684 = vmatprep.subr.bf16.mxu0 0
      %685 = vmatpush1.bf16.msra.mxu0 %v657
      %686 = vmatprep.subr.bf16.mxu0 0
      %687 = vmatpush1.bf16.msra.mxu0 %v656
      %688 = vmatprep.subr.bf16.mxu0 0
      %689 = vmatpush2.bf16.msra.mxu0 0
      %690 = vmatprep.subr.bf16.mxu0 0
      %691 = vmatpush2.bf16.msra.mxu0 0
      %692 = vmatprep.subr.bf16.mxu0 0
      %693 = vmatpush2.bf16.msra.mxu0 0
      %694 = vmatprep.subr.bf16.mxu0 0
      %695 = vmatpush2.bf16.msra.mxu0 0
      %696 = vmatprep.subr.bf16.mxu0 0
      %697 = vmatpush2.bf16.msra.mxu0 0
      %698 = vmatprep.subr.bf16.mxu0 0
      %699 = vmatpush2.bf16.msra.mxu0 0
      %700 = vmatprep.subr.bf16.mxu0 0
      %701 = vmatpush2.bf16.msra.mxu0 0
      %702 = vmatprep.subr.bf16.mxu0 0
      %703 = vmatpush2.bf16.msra.mxu0 0
      %704 = vmatprep.mubr.bf16.mxu0 0
      %705 = vmatmul.mubr.bf16.gmra.mxu0 %v560
      %v706 = vpop.f32.mrf.mxu0
      %v707 = vadd.f32 0.0, %v706
      %v708 = vpop.f32.mrf.mxu0
      %v709 = vpop.f32.mrf.mxu0
      %v710 = vadd.f32 0.0, %v709
      %v711 = vpop.f32.mrf.mxu0
      %712 = vmatprep.mubr.bf16.mxu0 0
      %713 = vmatmul.mubr.bf16.gmra.mxu0 %v561
      %v714 = vpop.f32.mrf.mxu0
      %v715 = vadd.f32 0.0, %v714
      %v716 = vpop.f32.mrf.mxu0
      %v717 = vpop.f32.mrf.mxu0
      %v718 = vadd.f32 0.0, %v717
      %v719 = vpop.f32.mrf.mxu0
      %720 = vmatprep.mubr.bf16.mxu0 0
      %721 = vmatmul.mubr.bf16.gmra.mxu0 %v562
      %v722 = vpop.f32.mrf.mxu0
      %v723 = vadd.f32 0.0, %v722
      %v724 = vpop.f32.mrf.mxu0
      %v725 = vpop.f32.mrf.mxu0
      %v726 = vadd.f32 0.0, %v725
      %v727 = vpop.f32.mrf.mxu0
      %728 = vmatprep.mubr.bf16.mxu0 0
      %729 = vmatmul.mubr.bf16.gmra.mxu0 %v563
      %v730 = vpop.f32.mrf.mxu0
      %v731 = vadd.f32 0.0, %v730
      %v732 = vpop.f32.mrf.mxu0
      %v733 = vpop.f32.mrf.mxu0
      %v734 = vadd.f32 0.0, %v733
      %v735 = vpop.f32.mrf.mxu0
      %736 = vmatprep.mubr.bf16.mxu0 0
      %737 = vmatmul.mubr.bf16.gmra.mxu0 %v564
      %v738 = vpop.f32.mrf.mxu0
      %v739 = vadd.f32 0.0, %v738
      %v740 = vpop.f32.mrf.mxu0
      %v741 = vpop.f32.mrf.mxu0
      %v742 = vadd.f32 0.0, %v741
      %v743 = vpop.f32.mrf.mxu0
      %744 = vmatprep.mubr.bf16.mxu0 0
      %745 = vmatmul.mubr.bf16.gmra.mxu0 %v565
      %v746 = vpop.f32.mrf.mxu0
      %v747 = vadd.f32 0.0, %v746
      %v748 = vpop.f32.mrf.mxu0
      %v749 = vpop.f32.mrf.mxu0
      %v750 = vadd.f32 0.0, %v749
      %v751 = vpop.f32.mrf.mxu0
      %752 = vmatprep.mubr.bf16.mxu0 0
      %753 = vmatmul.mubr.bf16.gmra.mxu0 %v566
      %v754 = vpop.f32.mrf.mxu0
      %v755 = vadd.f32 0.0, %v754
      %v756 = vpop.f32.mrf.mxu0
      %v757 = vpop.f32.mrf.mxu0
      %v758 = vadd.f32 0.0, %v757
      %v759 = vpop.f32.mrf.mxu0
      %760 = vmatprep.mubr.bf16.mxu0 0
      %761 = vmatmul.mubr.bf16.gmra.mxu0 %v567
      %v762 = vpop.f32.mrf.mxu0
      %v763 = vadd.f32 0.0, %v762
      %v764 = vpop.f32.mrf.mxu0
      %v765 = vpop.f32.mrf.mxu0
      %v766 = vadd.f32 0.0, %v765
      %v767 = vpop.f32.mrf.mxu0
      %768 = vmatprep.mubr.bf16.mxu0 0
      %769 = vmatmul.mubr.bf16.gmra.mxu0 %v568
      %v770 = vpop.f32.mrf.mxu0
      %v771 = vadd.f32 0.0, %v770
      %v772 = vpop.f32.mrf.mxu0
      %v773 = vpop.f32.mrf.mxu0
      %v774 = vadd.f32 0.0, %v773
      %v775 = vpop.f32.mrf.mxu0
      %776 = vmatprep.mubr.bf16.mxu0 0
      %777 = vmatmul.mubr.bf16.gmra.mxu0 %v569
      %v778 = vpop.f32.mrf.mxu0
      %v779 = vadd.f32 0.0, %v778
      %v780 = vpop.f32.mrf.mxu0
      %v781 = vpop.f32.mrf.mxu0
      %v782 = vadd.f32 0.0, %v781
      %v783 = vpop.f32.mrf.mxu0
      %784 = vmatprep.mubr.bf16.mxu0 0
      %785 = vmatmul.mubr.bf16.gmra.mxu0 %v570
      %v786 = vpop.f32.mrf.mxu0
      %v787 = vadd.f32 0.0, %v786
      %v788 = vpop.f32.mrf.mxu0
      %v789 = vpop.f32.mrf.mxu0
      %v790 = vadd.f32 0.0, %v789
      %v791 = vpop.f32.mrf.mxu0
      %792 = vmatprep.mubr.bf16.mxu0 0
      %793 = vmatmul.mubr.bf16.gmra.mxu0 %v571
      %v794 = vpop.f32.mrf.mxu0
      %v795 = vadd.f32 0.0, %v794
      %v796 = vpop.f32.mrf.mxu0
      %v797 = vpop.f32.mrf.mxu0
      %v798 = vadd.f32 0.0, %v797
      %v799 = vpop.f32.mrf.mxu0
      %800 = vmatprep.mubr.bf16.mxu0 0
      %801 = vmatmul.mubr.bf16.gmra.mxu0 %v572
      %v802 = vpop.f32.mrf.mxu0
      %v803 = vadd.f32 0.0, %v802
      %v804 = vpop.f32.mrf.mxu0
      %v805 = vpop.f32.mrf.mxu0
      %v806 = vadd.f32 0.0, %v805
      %v807 = vpop.f32.mrf.mxu0
      %808 = vmatprep.mubr.bf16.mxu0 0
      %809 = vmatmul.mubr.bf16.gmra.mxu0 %v573
      %v810 = vpop.f32.mrf.mxu0
      %v811 = vadd.f32 0.0, %v810
      %v812 = vpop.f32.mrf.mxu0
      %v813 = vpop.f32.mrf.mxu0
      %v814 = vadd.f32 0.0, %v813
      %v815 = vpop.f32.mrf.mxu0
      %816 = vmatprep.mubr.bf16.mxu0 0
      %817 = vmatmul.mubr.bf16.gmra.mxu0 %v574
      %v818 = vpop.f32.mrf.mxu0
      %v819 = vadd.f32 0.0, %v818
      %v820 = vpop.f32.mrf.mxu0
      %v821 = vpop.f32.mrf.mxu0
      %v822 = vadd.f32 0.0, %v821
      %v823 = vpop.f32.mrf.mxu0
      %824 = vmatprep.mubr.bf16.mxu0 0
      %825 = vmatmul.mubr.bf16.gmra.mxu0 %v575
      %v826 = vpop.f32.mrf.mxu0
      %v827 = vadd.f32 0.0, %v826
      %v828 = vpop.f32.mrf.mxu0
      %v829 = vpop.f32.mrf.mxu0
      %v830 = vadd.f32 0.0, %v829
      %v831 = vpop.f32.mrf.mxu0
      %832 = vmatprep.mubr.bf16.mxu0 0
      %833 = vmatmul.mubr.bf16.gmra.mxu0 %v576
      %v834 = vpop.f32.mrf.mxu0
      %v835 = vadd.f32 0.0, %v834
      %v836 = vpop.f32.mrf.mxu0
      %v837 = vpop.f32.mrf.mxu0
      %v838 = vadd.f32 0.0, %v837
      %v839 = vpop.f32.mrf.mxu0
      %840 = vmatprep.mubr.bf16.mxu0 0
      %841 = vmatmul.mubr.bf16.gmra.mxu0 %v577
      %v842 = vpop.f32.mrf.mxu0
      %v843 = vadd.f32 0.0, %v842
      %v844 = vpop.f32.mrf.mxu0
      %v845 = vpop.f32.mrf.mxu0
      %v846 = vadd.f32 0.0, %v845
      %v847 = vpop.f32.mrf.mxu0
      %848 = vmatprep.mubr.bf16.mxu0 0
      %849 = vmatmul.mubr.bf16.gmra.mxu0 %v578
      %v850 = vpop.f32.mrf.mxu0
      %v851 = vadd.f32 0.0, %v850
      %v852 = vpop.f32.mrf.mxu0
      %v853 = vpop.f32.mrf.mxu0
      %v854 = vadd.f32 0.0, %v853
      %v855 = vpop.f32.mrf.mxu0
      %856 = vmatprep.mubr.bf16.mxu0 0
      %857 = vmatmul.mubr.bf16.gmra.mxu0 %v579
      %v858 = vpop.f32.mrf.mxu0
      %v859 = vadd.f32 0.0, %v858
      %v860 = vpop.f32.mrf.mxu0
      %v861 = vpop.f32.mrf.mxu0
      %v862 = vadd.f32 0.0, %v861
      %v863 = vpop.f32.mrf.mxu0
      %864 = vmatprep.mubr.bf16.mxu0 0
      %865 = vmatmul.mubr.bf16.gmra.mxu0 %v580
      %v866 = vpop.f32.mrf.mxu0
      %v867 = vadd.f32 0.0, %v866
      %v868 = vpop.f32.mrf.mxu0
      %v869 = vpop.f32.mrf.mxu0
      %v870 = vadd.f32 0.0, %v869
      %v871 = vpop.f32.mrf.mxu0
      %872 = vmatprep.mubr.bf16.mxu0 0
      %873 = vmatmul.mubr.bf16.gmra.mxu0 %v581
      %v874 = vpop.f32.mrf.mxu0
      %v875 = vadd.f32 0.0, %v874
      %v876 = vpop.f32.mrf.mxu0
      %v877 = vpop.f32.mrf.mxu0
      %v878 = vadd.f32 0.0, %v877
      %v879 = vpop.f32.mrf.mxu0
      %880 = vmatprep.mubr.bf16.mxu0 0
      %881 = vmatmul.mubr.bf16.gmra.mxu0 %v582
      %v882 = vpop.f32.mrf.mxu0
      %v883 = vadd.f32 0.0, %v882
      %v884 = vpop.f32.mrf.mxu0
      %v885 = vpop.f32.mrf.mxu0
      %v886 = vadd.f32 0.0, %v885
      %v887 = vpop.f32.mrf.mxu0
      %888 = vmatprep.mubr.bf16.mxu0 0
      %889 = vmatmul.mubr.bf16.gmra.mxu0 %v583
      %v890 = vpop.f32.mrf.mxu0
      %v891 = vadd.f32 0.0, %v890
      %v892 = vpop.f32.mrf.mxu0
      %v893 = vpop.f32.mrf.mxu0
      %v894 = vadd.f32 0.0, %v893
      %v895 = vpop.f32.mrf.mxu0
      %896 = vmatprep.mubr.bf16.mxu0 0
      %897 = vmatmul.mubr.bf16.gmra.mxu0 %v584
      %v898 = vpop.f32.mrf.mxu0
      %v899 = vadd.f32 0.0, %v898
      %v900 = vpop.f32.mrf.mxu0
      %v901 = vpop.f32.mrf.mxu0
      %v902 = vadd.f32 0.0, %v901
      %v903 = vpop.f32.mrf.mxu0
      %904 = vmatprep.mubr.bf16.mxu0 0
      %905 = vmatmul.mubr.bf16.gmra.mxu0 %v585
      %v906 = vpop.f32.mrf.mxu0
      %v907 = vadd.f32 0.0, %v906
      %v908 = vpop.f32.mrf.mxu0
      %v909 = vpop.f32.mrf.mxu0
      %v910 = vadd.f32 0.0, %v909
      %v911 = vpop.f32.mrf.mxu0
      %912 = vmatprep.mubr.bf16.mxu0 0
      %913 = vmatmul.mubr.bf16.gmra.mxu0 %v586
      %v914 = vpop.f32.mrf.mxu0
      %v915 = vadd.f32 0.0, %v914
      %v916 = vpop.f32.mrf.mxu0
      %v917 = vpop.f32.mrf.mxu0
      %v918 = vadd.f32 0.0, %v917
      %v919 = vpop.f32.mrf.mxu0
      %920 = vmatprep.mubr.bf16.mxu0 0
      %921 = vmatmul.mubr.bf16.gmra.mxu0 %v587
      %v922 = vpop.f32.mrf.mxu0
      %v923 = vadd.f32 0.0, %v922
      %v924 = vpop.f32.mrf.mxu0
      %v925 = vpop.f32.mrf.mxu0
      %v926 = vadd.f32 0.0, %v925
      %v927 = vpop.f32.mrf.mxu0
      %928 = vmatprep.mubr.bf16.mxu0 0
      %929 = vmatmul.mubr.bf16.gmra.mxu0 %v588
      %v930 = vpop.f32.mrf.mxu0
      %v931 = vadd.f32 0.0, %v930
      %v932 = vpop.f32.mrf.mxu0
      %v933 = vpop.f32.mrf.mxu0
      %v934 = vadd.f32 0.0, %v933
      %v935 = vpop.f32.mrf.mxu0
      %936 = vmatprep.mubr.bf16.mxu0 0
      %937 = vmatmul.mubr.bf16.gmra.mxu0 %v589
      %v938 = vpop.f32.mrf.mxu0
      %v939 = vadd.f32 0.0, %v938
      %v940 = vpop.f32.mrf.mxu0
      %v941 = vpop.f32.mrf.mxu0
      %v942 = vadd.f32 0.0, %v941
      %v943 = vpop.f32.mrf.mxu0
      %944 = vmatprep.mubr.bf16.mxu0 0
      %945 = vmatmul.mubr.bf16.gmra.mxu0 %v590
      %v946 = vpop.f32.mrf.mxu0
      %v947 = vadd.f32 0.0, %v946
      %v948 = vpop.f32.mrf.mxu0
      %v949 = vpop.f32.mrf.mxu0
      %v950 = vadd.f32 0.0, %v949
      %v951 = vpop.f32.mrf.mxu0
      %952 = vmatprep.mubr.bf16.mxu0 0
      %953 = vmatmul.mubr.bf16.gmra.mxu0 %v591
      %v954 = vpop.f32.mrf.mxu0
      %v955 = vadd.f32 0.0, %v954
      %v956 = vpop.f32.mrf.mxu0
      %v957 = vpop.f32.mrf.mxu0
      %v958 = vadd.f32 0.0, %v957
      %v959 = vpop.f32.mrf.mxu0
      %960 = vdwg.mxu0
      %v961 = vadd.f32 %v288, %v707
      %v962 = vadd.f32 %v289, %v710
      %v963 = vadd.f32 %v290, %v715
      %v964 = vadd.f32 %v291, %v718
      %v965 = vadd.f32 %v292, %v723
      %v966 = vadd.f32 %v293, %v726
      %v967 = vadd.f32 %v294, %v731
      %v968 = vadd.f32 %v295, %v734
      %v969 = vadd.f32 %v296, %v739
      %v970 = vadd.f32 %v297, %v742
      %v971 = vadd.f32 %v298, %v747
      %v972 = vadd.f32 %v299, %v750
      %v973 = vadd.f32 %v300, %v755
      %v974 = vadd.f32 %v301, %v758
      %v975 = vadd.f32 %v302, %v763
      %v976 = vadd.f32 %v303, %v766
      %v977 = vadd.f32 %v304, %v771
      %v978 = vadd.f32 %v305, %v774
      %v979 = vadd.f32 %v306, %v779
      %v980 = vadd.f32 %v307, %v782
      %v981 = vadd.f32 %v308, %v787
      %v982 = vadd.f32 %v309, %v790
      %v983 = vadd.f32 %v310, %v795
      %v984 = vadd.f32 %v311, %v798
      %v985 = vadd.f32 %v312, %v803
      %v986 = vadd.f32 %v313, %v806
      %v987 = vadd.f32 %v314, %v811
      %v988 = vadd.f32 %v315, %v814
      %v989 = vadd.f32 %v316, %v819
      %v990 = vadd.f32 %v317, %v822
      %v991 = vadd.f32 %v318, %v827
      %v992 = vadd.f32 %v319, %v830
      %v993 = vadd.f32 %v320, %v835
      %v994 = vadd.f32 %v321, %v838
      %v995 = vadd.f32 %v322, %v843
      %v996 = vadd.f32 %v323, %v846
      %v997 = vadd.f32 %v324, %v851
      %v998 = vadd.f32 %v325, %v854
      %v999 = vadd.f32 %v326, %v859
      %v1000 = vadd.f32 %v327, %v862
      %v1001 = vadd.f32 %v328, %v867
      %v1002 = vadd.f32 %v329, %v870
      %v1003 = vadd.f32 %v330, %v875
      %v1004 = vadd.f32 %v331, %v878
      %v1005 = vadd.f32 %v332, %v883
      %v1006 = vadd.f32 %v333, %v886
      %v1007 = vadd.f32 %v334, %v891
      %v1008 = vadd.f32 %v335, %v894
      %v1009 = vadd.f32 %v336, %v899
      %v1010 = vadd.f32 %v337, %v902
      %v1011 = vadd.f32 %v338, %v907
      %v1012 = vadd.f32 %v339, %v910
      %v1013 = vadd.f32 %v340, %v915
      %v1014 = vadd.f32 %v341, %v918
      %v1015 = vadd.f32 %v342, %v923
      %v1016 = vadd.f32 %v343, %v926
      %v1017 = vadd.f32 %v344, %v931
      %v1018 = vadd.f32 %v345, %v934
      %v1019 = vadd.f32 %v346, %v939
      %v1020 = vadd.f32 %v347, %v942
      %v1021 = vadd.f32 %v348, %v947
      %v1022 = vadd.f32 %v349, %v950
      %v1023 = vadd.f32 %v350, %v955
      %v1024 = vadd.f32 %v351, %v958
      %1025 = vst [vmem:[#allocation2] sm:$0xff] %v961
      %1026 = vst [vmem:[#allocation2 + $0x8] sm:$0xff] %v962
      %1027 = vst [vmem:[#allocation2 + $0x10] sm:$0xff] %v963
      %1028 = vst [vmem:[#allocation2 + $0x18] sm:$0xff] %v964
      %1029 = vst [vmem:[#allocation2 + $0x20] sm:$0xff] %v965
      %1030 = vst [vmem:[#allocation2 + $0x28] sm:$0xff] %v966
      %1031 = vst [vmem:[#allocation2 + $0x30] sm:$0xff] %v967
      %1032 = vst [vmem:[#allocation2 + $0x38] sm:$0xff] %v968
      %1033 = vst [vmem:[#allocation2 + $0x40] sm:$0xff] %v969
      %1034 = vst [vmem:[#allocation2 + $0x48] sm:$0xff] %v970
      %1035 = vst [vmem:[#allocation2 + $0x50] sm:$0xff] %v971
      %1036 = vst [vmem:[#allocation2 + $0x58] sm:$0xff] %v972
      %1037 = vst [vmem:[#allocation2 + $0x60] sm:$0xff] %v973
      %1038 = vst [vmem:[#allocation2 + $0x68] sm:$0xff] %v974
      %1039 = vst [vmem:[#allocation2 + $0x70] sm:$0xff] %v975
      %1040 = vst [vmem:[#allocation2 + $0x78] sm:$0xff] %v976
      %1041 = vst [vmem:[#allocation2 + $0x80] sm:$0xff] %v977
      %1042 = vst [vmem:[#allocation2 + $0x88] sm:$0xff] %v978
      %1043 = vst [vmem:[#allocation2 + $0x90] sm:$0xff] %v979
      %1044 = vst [vmem:[#allocation2 + $0x98] sm:$0xff] %v980
      %1045 = vst [vmem:[#allocation2 + $0xa0] sm:$0xff] %v981
      %1046 = vst [vmem:[#allocation2 + $0xa8] sm:$0xff] %v982
      %1047 = vst [vmem:[#allocation2 + $0xb0] sm:$0xff] %v983
      %1048 = vst [vmem:[#allocation2 + $0xb8] sm:$0xff] %v984
      %1049 = vst [vmem:[#allocation2 + $0xc0] sm:$0xff] %v985
      %1050 = vst [vmem:[#allocation2 + $0xc8] sm:$0xff] %v986
      %1051 = vst [vmem:[#allocation2 + $0xd0] sm:$0xff] %v987
      %1052 = vst [vmem:[#allocation2 + $0xd8] sm:$0xff] %v988
      %1053 = vst [vmem:[#allocation2 + $0xe0] sm:$0xff] %v989
      %1054 = vst [vmem:[#allocation2 + $0xe8] sm:$0xff] %v990
      %1055 = vst [vmem:[#allocation2 + $0xf0] sm:$0xff] %v991
      %1056 = vst [vmem:[#allocation2 + $0xf8] sm:$0xff] %v992
      %1057 = vst [vmem:[#allocation2 + $0x100] sm:$0xff] %v993
      %1058 = vst [vmem:[#allocation2 + $0x108] sm:$0xff] %v994
      %1059 = vst [vmem:[#allocation2 + $0x110] sm:$0xff] %v995
      %1060 = vst [vmem:[#allocation2 + $0x118] sm:$0xff] %v996
      %1061 = vst [vmem:[#allocation2 + $0x120] sm:$0xff] %v997
      %1062 = vst [vmem:[#allocation2 + $0x128] sm:$0xff] %v998
      %1063 = vst [vmem:[#allocation2 + $0x130] sm:$0xff] %v999
      %1064 = vst [vmem:[#allocation2 + $0x138] sm:$0xff] %v1000
      %1065 = vst [vmem:[#allocation2 + $0x140] sm:$0xff] %v1001
      %1066 = vst [vmem:[#allocation2 + $0x148] sm:$0xff] %v1002
      %1067 = vst [vmem:[#allocation2 + $0x150] sm:$0xff] %v1003
      %1068 = vst [vmem:[#allocation2 + $0x158] sm:$0xff] %v1004
      %1069 = vst [vmem:[#allocation2 + $0x160] sm:$0xff] %v1005
      %1070 = vst [vmem:[#allocation2 + $0x168] sm:$0xff] %v1006
      %1071 = vst [vmem:[#allocation2 + $0x170] sm:$0xff] %v1007
      %1072 = vst [vmem:[#allocation2 + $0x178] sm:$0xff] %v1008
      %1073 = vst [vmem:[#allocation2 + $0x180] sm:$0xff] %v1009
      %1074 = vst [vmem:[#allocation2 + $0x188] sm:$0xff] %v1010
      %1075 = vst [vmem:[#allocation2 + $0x190] sm:$0xff] %v1011
      %1076 = vst [vmem:[#allocation2 + $0x198] sm:$0xff] %v1012
      %1077 = vst [vmem:[#allocation2 + $0x1a0] sm:$0xff] %v1013
      %1078 = vst [vmem:[#allocation2 + $0x1a8] sm:$0xff] %v1014
      %1079 = vst [vmem:[#allocation2 + $0x1b0] sm:$0xff] %v1015
      %1080 = vst [vmem:[#allocation2 + $0x1b8] sm:$0xff] %v1016
      %1081 = vst [vmem:[#allocation2 + $0x1c0] sm:$0xff] %v1017
      %1082 = vst [vmem:[#allocation2 + $0x1c8] sm:$0xff] %v1018
      %1083 = vst [vmem:[#allocation2 + $0x1d0] sm:$0xff] %v1019
      %1084 = vst [vmem:[#allocation2 + $0x1d8] sm:$0xff] %v1020
      %1085 = vst [vmem:[#allocation2 + $0x1e0] sm:$0xff] %v1021
      %1086 = vst [vmem:[#allocation2 + $0x1e8] sm:$0xff] %v1022
      %1087 = vst [vmem:[#allocation2 + $0x1f0] sm:$0xff] %v1023
      %1088 = vst [vmem:[#allocation2 + $0x1f8] sm:$0xff] %v1024
      // Predicated region
      $region37: #{phm_conv3d.1} parent=31 // pred_check
        %p1089 = pneg %p220
      $region38: #{phm_conv3d.1} parent=31 // pred_check_branch
        %1091 = sbr.rel (%p1089) target = $region40
      $region39: #{phm_conv3d.1} parent=31 // pred_region
        %v1092 = vld [vmem:[#allocation2] sm:$0xff]
        %v1093 = vld [vmem:[#allocation2 + $0x8] sm:$0xff]
        %v1094 = vld [vmem:[#allocation2 + $0x10] sm:$0xff]
        %v1095 = vld [vmem:[#allocation2 + $0x18] sm:$0xff]
        %v1096 = vld [vmem:[#allocation2 + $0x20] sm:$0xff]
        %v1097 = vld [vmem:[#allocation2 + $0x28] sm:$0xff]
        %v1098 = vld [vmem:[#allocation2 + $0x30] sm:$0xff]
        %v1099 = vld [vmem:[#allocation2 + $0x38] sm:$0xff]
        %v1100 = vld [vmem:[#allocation2 + $0x40] sm:$0xff]
        %v1101 = vld [vmem:[#allocation2 + $0x48] sm:$0xff]
        %v1102 = vld [vmem:[#allocation2 + $0x50] sm:$0xff]
        %v1103 = vld [vmem:[#allocation2 + $0x58] sm:$0xff]
        %v1104 = vld [vmem:[#allocation2 + $0x60] sm:$0xff]
        %v1105 = vld [vmem:[#allocation2 + $0x68] sm:$0xff]
        %v1106 = vld [vmem:[#allocation2 + $0x70] sm:$0xff]
        %v1107 = vld [vmem:[#allocation2 + $0x78] sm:$0xff]
        %v1108 = vld [vmem:[#allocation2 + $0x80] sm:$0xff]
        %v1109 = vld [vmem:[#allocation2 + $0x88] sm:$0xff]
        %v1110 = vld [vmem:[#allocation2 + $0x90] sm:$0xff]
        %v1111 = vld [vmem:[#allocation2 + $0x98] sm:$0xff]
        %v1112 = vld [vmem:[#allocation2 + $0xa0] sm:$0xff]
        %v1113 = vld [vmem:[#allocation2 + $0xa8] sm:$0xff]
        %v1114 = vld [vmem:[#allocation2 + $0xb0] sm:$0xff]
        %v1115 = vld [vmem:[#allocation2 + $0xb8] sm:$0xff]
        %v1116 = vld [vmem:[#allocation2 + $0xc0] sm:$0xff]
        %v1117 = vld [vmem:[#allocation2 + $0xc8] sm:$0xff]
        %v1118 = vld [vmem:[#allocation2 + $0xd0] sm:$0xff]
        %v1119 = vld [vmem:[#allocation2 + $0xd8] sm:$0xff]
        %v1120 = vld [vmem:[#allocation2 + $0xe0] sm:$0xff]
        %v1121 = vld [vmem:[#allocation2 + $0xe8] sm:$0xff]
        %v1122 = vld [vmem:[#allocation2 + $0xf0] sm:$0xff]
        %v1123 = vld [vmem:[#allocation2 + $0xf8] sm:$0xff]
        %v1124 = vld [vmem:[#allocation2 + $0x100] sm:$0xff]
        %v1125 = vld [vmem:[#allocation2 + $0x108] sm:$0xff]
        %v1126 = vld [vmem:[#allocation2 + $0x110] sm:$0xff]
        %v1127 = vld [vmem:[#allocation2 + $0x118] sm:$0xff]
        %v1128 = vld [vmem:[#allocation2 + $0x120] sm:$0xff]
        %v1129 = vld [vmem:[#allocation2 + $0x128] sm:$0xff]
        %v1130 = vld [vmem:[#allocation2 + $0x130] sm:$0xff]
        %v1131 = vld [vmem:[#allocation2 + $0x138] sm:$0xff]
        %v1132 = vld [vmem:[#allocation2 + $0x140] sm:$0xff]
        %v1133 = vld [vmem:[#allocation2 + $0x148] sm:$0xff]
        %v1134 = vld [vmem:[#allocation2 + $0x150] sm:$0xff]
        %v1135 = vld [vmem:[#allocation2 + $0x158] sm:$0xff]
        %v1136 = vld [vmem:[#allocation2 + $0x160] sm:$0xff]
        %v1137 = vld [vmem:[#allocation2 + $0x168] sm:$0xff]
        %v1138 = vld [vmem:[#allocation2 + $0x170] sm:$0xff]
        %v1139 = vld [vmem:[#allocation2 + $0x178] sm:$0xff]
        %v1140 = vld [vmem:[#allocation2 + $0x180] sm:$0xff]
        %v1141 = vld [vmem:[#allocation2 + $0x188] sm:$0xff]
        %v1142 = vld [vmem:[#allocation2 + $0x190] sm:$0xff]
        %v1143 = vld [vmem:[#allocation2 + $0x198] sm:$0xff]
        %v1144 = vld [vmem:[#allocation2 + $0x1a0] sm:$0xff]
        %v1145 = vld [vmem:[#allocation2 + $0x1a8] sm:$0xff]
        %v1146 = vld [vmem:[#allocation2 + $0x1b0] sm:$0xff]
        %v1147 = vld [vmem:[#allocation2 + $0x1b8] sm:$0xff]
        %v1148 = vld [vmem:[#allocation2 + $0x1c0] sm:$0xff]
        %v1149 = vld [vmem:[#allocation2 + $0x1c8] sm:$0xff]
        %v1150 = vld [vmem:[#allocation2 + $0x1d0] sm:$0xff]
        %v1151 = vld [vmem:[#allocation2 + $0x1d8] sm:$0xff]
        %v1152 = vld [vmem:[#allocation2 + $0x1e0] sm:$0xff]
        %v1153 = vld [vmem:[#allocation2 + $0x1e8] sm:$0xff]
        %v1154 = vld [vmem:[#allocation2 + $0x1f0] sm:$0xff]
        %v1155 = vld [vmem:[#allocation2 + $0x1f8] sm:$0xff]
        %v1156 = vld [vmem:[%s2] sm:$0x1]
        %v1158 = vlaneseq
        %v1159 = vshrl.u32 %v1158, 7
        %v1160 = vsub.s32 0, %v1159
        %v1161 = vrot.slane %v1156, %v1160
        %v1163 = vadd.f32 %v1092, %v1161
        %v1164 = vadd.f32 %v1093, %v1161
        %v1165 = vadd.f32 %v1094, %v1161
        %v1166 = vadd.f32 %v1095, %v1161
        %v1167 = vadd.f32 %v1096, %v1161
        %v1168 = vadd.f32 %v1097, %v1161
        %v1169 = vadd.f32 %v1098, %v1161
        %v1170 = vadd.f32 %v1099, %v1161
        %v1171 = vadd.f32 %v1100, %v1161
        %v1172 = vadd.f32 %v1101, %v1161
        %v1173 = vadd.f32 %v1102, %v1161
        %v1174 = vadd.f32 %v1103, %v1161
        %v1175 = vadd.f32 %v1104, %v1161
        %v1176 = vadd.f32 %v1105, %v1161
        %v1177 = vadd.f32 %v1106, %v1161
        %v1178 = vadd.f32 %v1107, %v1161
        %v1179 = vadd.f32 %v1108, %v1161
        %v1180 = vadd.f32 %v1109, %v1161
        %v1181 = vadd.f32 %v1110, %v1161
        %v1182 = vadd.f32 %v1111, %v1161
        %v1183 = vadd.f32 %v1112, %v1161
        %v1184 = vadd.f32 %v1113, %v1161
        %v1185 = vadd.f32 %v1114, %v1161
        %v1186 = vadd.f32 %v1115, %v1161
        %v1187 = vadd.f32 %v1116, %v1161
        %v1188 = vadd.f32 %v1117, %v1161
        %v1189 = vadd.f32 %v1118, %v1161
        %v1190 = vadd.f32 %v1119, %v1161
        %v1191 = vadd.f32 %v1120, %v1161
        %v1192 = vadd.f32 %v1121, %v1161
        %v1193 = vadd.f32 %v1122, %v1161
        %v1194 = vadd.f32 %v1123, %v1161
        %v1195 = vadd.f32 %v1124, %v1161
        %v1196 = vadd.f32 %v1125, %v1161
        %v1197 = vadd.f32 %v1126, %v1161
        %v1198 = vadd.f32 %v1127, %v1161
        %v1199 = vadd.f32 %v1128, %v1161
        %v1200 = vadd.f32 %v1129, %v1161
        %v1201 = vadd.f32 %v1130, %v1161
        %v1202 = vadd.f32 %v1131, %v1161
        %v1203 = vadd.f32 %v1132, %v1161
        %v1204 = vadd.f32 %v1133, %v1161
        %v1205 = vadd.f32 %v1134, %v1161
        %v1206 = vadd.f32 %v1135, %v1161
        %v1207 = vadd.f32 %v1136, %v1161
        %v1208 = vadd.f32 %v1137, %v1161
        %v1209 = vadd.f32 %v1138, %v1161
        %v1210 = vadd.f32 %v1139, %v1161
        %v1211 = vadd.f32 %v1140, %v1161
        %v1212 = vadd.f32 %v1141, %v1161
        %v1213 = vadd.f32 %v1142, %v1161
        %v1214 = vadd.f32 %v1143, %v1161
        %v1215 = vadd.f32 %v1144, %v1161
        %v1216 = vadd.f32 %v1145, %v1161
        %v1217 = vadd.f32 %v1146, %v1161
        %v1218 = vadd.f32 %v1147, %v1161
        %v1219 = vadd.f32 %v1148, %v1161
        %v1220 = vadd.f32 %v1149, %v1161
        %v1221 = vadd.f32 %v1150, %v1161
        %v1222 = vadd.f32 %v1151, %v1161
        %v1223 = vadd.f32 %v1152, %v1161
        %v1224 = vadd.f32 %v1153, %v1161
        %v1225 = vadd.f32 %v1154, %v1161
        %v1226 = vadd.f32 %v1155, %v1161
        %1227 = vst [vmem:[%s217] sm:$0xff] %v1163
        %1228 = vst [vmem:[%s217 + $0x8] sm:$0xff] %v1164
        %1229 = vst [vmem:[%s217 + $0x10] sm:$0xff] %v1165
        %1230 = vst [vmem:[%s217 + $0x18] sm:$0xff] %v1166
        %1231 = vst [vmem:[%s217 + $0x20] sm:$0xff] %v1167
        %1232 = vst [vmem:[%s217 + $0x28] sm:$0xff] %v1168
        %1233 = vst [vmem:[%s217 + $0x30] sm:$0xff] %v1169
        %1234 = vst [vmem:[%s217 + $0x38] sm:$0xff] %v1170
        %1235 = vst [vmem:[%s217 + $0x40] sm:$0xff] %v1171
        %1236 = vst [vmem:[%s217 + $0x48] sm:$0xff] %v1172
        %1237 = vst [vmem:[%s217 + $0x50] sm:$0xff] %v1173
        %1238 = vst [vmem:[%s217 + $0x58] sm:$0xff] %v1174
        %1239 = vst [vmem:[%s217 + $0x60] sm:$0xff] %v1175
        %1240 = vst [vmem:[%s217 + $0x68] sm:$0xff] %v1176
        %1241 = vst [vmem:[%s217 + $0x70] sm:$0xff] %v1177
        %1242 = vst [vmem:[%s217 + $0x78] sm:$0xff] %v1178
        %1243 = vst [vmem:[%s217 + $0x80] sm:$0xff] %v1179
        %1244 = vst [vmem:[%s217 + $0x88] sm:$0xff] %v1180
        %1245 = vst [vmem:[%s217 + $0x90] sm:$0xff] %v1181
        %1246 = vst [vmem:[%s217 + $0x98] sm:$0xff] %v1182
        %1247 = vst [vmem:[%s217 + $0xa0] sm:$0xff] %v1183
        %1248 = vst [vmem:[%s217 + $0xa8] sm:$0xff] %v1184
        %1249 = vst [vmem:[%s217 + $0xb0] sm:$0xff] %v1185
        %1250 = vst [vmem:[%s217 + $0xb8] sm:$0xff] %v1186
        %1251 = vst [vmem:[%s217 + $0xc0] sm:$0xff] %v1187
        %1252 = vst [vmem:[%s217 + $0xc8] sm:$0xff] %v1188
        %1253 = vst [vmem:[%s217 + $0xd0] sm:$0xff] %v1189
        %1254 = vst [vmem:[%s217 + $0xd8] sm:$0xff] %v1190
        %1255 = vst [vmem:[%s217 + $0xe0] sm:$0xff] %v1191
        %1256 = vst [vmem:[%s217 + $0xe8] sm:$0xff] %v1192
        %1257 = vst [vmem:[%s217 + $0xf0] sm:$0xff] %v1193
        %1258 = vst [vmem:[%s217 + $0xf8] sm:$0xff] %v1194
        %1259 = vst [vmem:[%s217 + $0x100] sm:$0xff] %v1195
        %1260 = vst [vmem:[%s217 + $0x108] sm:$0xff] %v1196
        %1261 = vst [vmem:[%s217 + $0x110] sm:$0xff] %v1197
        %1262 = vst [vmem:[%s217 + $0x118] sm:$0xff] %v1198
        %1263 = vst [vmem:[%s217 + $0x120] sm:$0xff] %v1199
        %1264 = vst [vmem:[%s217 + $0x128] sm:$0xff] %v1200
        %1265 = vst [vmem:[%s217 + $0x130] sm:$0xff] %v1201
        %1266 = vst [vmem:[%s217 + $0x138] sm:$0xff] %v1202
        %1267 = vst [vmem:[%s217 + $0x140] sm:$0xff] %v1203
        %1268 = vst [vmem:[%s217 + $0x148] sm:$0xff] %v1204
        %1269 = vst [vmem:[%s217 + $0x150] sm:$0xff] %v1205
        %1270 = vst [vmem:[%s217 + $0x158] sm:$0xff] %v1206
        %1271 = vst [vmem:[%s217 + $0x160] sm:$0xff] %v1207
        %1272 = vst [vmem:[%s217 + $0x168] sm:$0xff] %v1208
        %1273 = vst [vmem:[%s217 + $0x170] sm:$0xff] %v1209
        %1274 = vst [vmem:[%s217 + $0x178] sm:$0xff] %v1210
        %1275 = vst [vmem:[%s217 + $0x180] sm:$0xff] %v1211
        %1276 = vst [vmem:[%s217 + $0x188] sm:$0xff] %v1212
        %1277 = vst [vmem:[%s217 + $0x190] sm:$0xff] %v1213
        %1278 = vst [vmem:[%s217 + $0x198] sm:$0xff] %v1214
        %1279 = vst [vmem:[%s217 + $0x1a0] sm:$0xff] %v1215
        %1280 = vst [vmem:[%s217 + $0x1a8] sm:$0xff] %v1216
        %1281 = vst [vmem:[%s217 + $0x1b0] sm:$0xff] %v1217
        %1282 = vst [vmem:[%s217 + $0x1b8] sm:$0xff] %v1218
        %1283 = vst [vmem:[%s217 + $0x1c0] sm:$0xff] %v1219
        %1284 = vst [vmem:[%s217 + $0x1c8] sm:$0xff] %v1220
        %1285 = vst [vmem:[%s217 + $0x1d0] sm:$0xff] %v1221
        %1286 = vst [vmem:[%s217 + $0x1d8] sm:$0xff] %v1222
        %1287 = vst [vmem:[%s217 + $0x1e0] sm:$0xff] %v1223
        %1288 = vst [vmem:[%s217 + $0x1e8] sm:$0xff] %v1224
        %1289 = vst [vmem:[%s217 + $0x1f0] sm:$0xff] %v1225
        %1290 = vst [vmem:[%s217 + $0x1f8] sm:$0xff] %v1226
      $region40: #{phm_conv3d.1} parent=31 // pred_fallthru
        _
      %s1291 = smul.u32 64, %s18
      %p1292 = scmp.lt.s32.totalorder %s1291, 127
      %s1293 = scalar_select %p1292, %s1291, 127
      %s1294 = smul.addr %s1293, 8
      %s1295 = scalar_lea.vmem %s3, %s1294
      // Predicated region
      $region41: #{phm_conv3d.1} parent=31 // pred_check
        %p1296 = pneg %p119
      $region42: #{phm_conv3d.1} parent=31 // pred_check_branch
        %1298 = sbr.rel (%p1296) target = $region44
      $region43: #{phm_conv3d.1} parent=31 // pred_region
        %s1299 = smul.u32 64, %s18
      $region44: #{phm_conv3d.1} parent=31 // pred_fallthru
        _
    $region32: #{phm_conv3d.1} parent=5 // pred_fallthru
      _
    %p1300 = scmp.le.s32.totalorder 2, %s9
    // Predicated region
    $region45: #{phm_conv3d.1} parent=5 // pred_check
      %p1301 = pneg %p1300
    $region46: #{phm_conv3d.1} parent=5 // pred_check_branch
      %1303 = sbr.rel (%p1301) target = $region48
    $region47: #{phm_conv3d.1} parent=5 // pred_region
      %s1304 = ssub.s32 %s9, 2
      // Predicated region
      $region49: #{phm_conv3d.1} parent=47 // pred_check
        %p1305 = pneg %p125
      $region50: #{phm_conv3d.1} parent=47 // pred_check_branch
        %1307 = sbr.rel (%p1305) target = $region52
      $region51: #{phm_conv3d.1} parent=47 // pred_region
        %s1308 = smul.u32 64, %s20
        %p1309 = scmp.lt.s32.totalorder %s1308, 127
        %s1310 = scalar_select %p1309, %s1308, 127
        %s1311 = smul.addr %s1310, 8
        %s1312 = scalar_lea.vmem %s3, %s1311
      $region52: #{phm_conv3d.1} parent=47 // pred_fallthru
        _
    $region48: #{phm_conv3d.1} parent=5 // pred_fallthru
      _
  $region6: #{phm_conv3d.1} parent=0 // loop_footer
    %s13 = sadd.s32 1, %s9
  $region7: #{phm_conv3d.1} parent=0 // loop_footer_branch
    %8 = sbr.rel target = $region3
  $region8: #{phm_conv3d.1} parent=0 // loop_exit
    _

</llo_original>
